<compile_context>
chip_gen: v7x
topology: tpu7x:2x2x1
jax: 0.10.0
libtpu: 0.0.40
codegen_flags: <defaults>
</compile_context>

<pallas_src>
import functools

import jax
import jax.numpy as jnp
from jax.experimental import pallas as pl
from jax.experimental.pallas import tpu as pltpu


def _round_up(x, m):
    return -(-x // m) * m


def _mlp_body(x_ref, w1_ref, b1_ref, w2_ref, b2_ref, w3_ref, b3_ref):
    """fc1/fc2/fc3 + ReLU. bf16 MXU operands, f32 accumulation.

    Returns the fc3+ReLU activations in f32 (feeds LayerNorm stats or fc_out).
    """
    x = x_ref[...].astype(jnp.bfloat16)          # cast in-kernel (no wrapper pass)
    h = jnp.dot(x, w1_ref[...], preferred_element_type=jnp.float32) + b1_ref[...]
    h = jnp.maximum(h.astype(jnp.bfloat16), 0.0)  # bf16 ReLU feeding next matmul
    h = jnp.dot(h, w2_ref[...], preferred_element_type=jnp.float32) + b2_ref[...]
    h = jnp.maximum(h.astype(jnp.bfloat16), 0.0)
    h = jnp.dot(h, w3_ref[...], preferred_element_type=jnp.float32) + b3_ref[...]
    return jnp.maximum(h, 0.0)                    # keep f32 for LN stats / fc_out


def _dnn_kernel_ln(x_ref, w1_ref, b1_ref, w2_ref, b2_ref, w3_ref, b3_ref,
                   gw_ref, c1_ref, c2_ref, o_ref):
    """out_features == 1 path: LayerNorm + fc_out fused into per-row reductions.

    y = rsqrt(var + eps) * (sum(h*gw) - mean*c1) + c2
      with gw = gamma*wo, c1 = sum(gamma*wo), c2 = sum(beta*wo) + bo.
    """
    h = _mlp_body(x_ref, w1_ref, b1_ref, w2_ref, b2_ref, w3_ref, b3_ref)
    inv_d = 1.0 / h.shape[-1]
    mean = jnp.sum(h, axis=-1, keepdims=True) * inv_d
    msq = jnp.sum(h * h, axis=-1, keepdims=True) * inv_d
    var = jnp.maximum(msq - mean * mean, 0.0)     # clamp one-pass cancellation
    sg = jnp.sum(h * gw_ref[...], axis=-1, keepdims=True)
    y = jax.lax.rsqrt(var + 1e-5) * (sg - mean * c1_ref[...]) + c2_ref[...]
    # TODO(synk): lane-dense (1, TB) output layout would cut masked stores; the
    # (TB, 1) store is kept to avoid an in-kernel sublane->lane relayout.
    o_ref[...] = y.astype(o_ref.dtype)


def _dnn_kernel_mm(x_ref, w1_ref, b1_ref, w2_ref, b2_ref, w3_ref, b3_ref,
                   wo_ref, bo_ref, o_ref):
    """General out_features path: plain fc_out matmul (no LayerNorm)."""
    h = _mlp_body(x_ref, w1_ref, b1_ref, w2_ref, b2_ref, w3_ref, b3_ref)
    y = jnp.dot(h.astype(jnp.bfloat16), wo_ref[...],
                preferred_element_type=jnp.float32) + bo_ref[...]
    o_ref[...] = y.astype(o_ref.dtype)


def _pick_block_batch(B, block_batch):
    if block_batch is not None:
        tb = max(16, _round_up(block_batch, 16))   # bf16 sublane packing
        return B if tb >= B else tb
    if B <= 512:
        return B                                   # one full-extent tile (always legal)
    # Large batch: big tiles amortize per-grid-step overhead; cap so the
    # "parallel" grid has >= 2 steps (keeps both v7x TensorCores busy).
    return min(1024, max(256, _round_up(_round_up(B, 2) // 2, 256)))


def dnn_forward(x, params, out_features, *, block_batch=None):
    """Fused DNN forward; batch-tiled grid, weights VMEM-resident."""
    w1, b1, w2, b2, w3, b3, gamma, beta, wo, bo = params
    B, in_f = x.shape
    emb = w3.shape[1]
    use_layernorm = (out_features == 1)

    TB = _pick_block_batch(B, block_batch)
    G = pl.cdiv(B, TB)

    # Weights cast once to bf16 for the MXU (f32 accumulation in-kernel).
    # x stays f32 and is cast in-kernel: no extra wrapper-side HBM pass.
    w1b = w1.astype(jnp.bfloat16)
    w2b = w2.astype(jnp.bfloat16)
    w3b = w3.astype(jnp.bfloat16)

    def resident(a):
        # Constant index_map: same block every grid step -> stays VMEM-resident
        # (Pallas skips the re-DMA).
        # TODO(synk): add pipeline_mode=pl.Buffered(1) once in_features/emb_dim
        # grow large enough that double-buffered weights threaten v7x's 64 MiB.
        return pl.BlockSpec(a.shape, lambda i: (0,) * a.ndim)

    mlp_specs = [
        pl.BlockSpec((TB, in_f), lambda i: (i, 0)),   # x tile (pipelined)
        resident(w1b), resident(b1),
        resident(w2b), resident(b2),
        resident(w3b), resident(b3),
    ]

    if use_layernorm:
        # Fold LayerNorm affine + fc_out into precomputed per-row constants.
        wo_row = wo.reshape(1, emb).astype(jnp.float32)
        gw = (gamma * wo_row).astype(jnp.float32)                   # (1, emb)
        c1 = jnp.sum(gamma * wo_row).reshape(1, 1)                  # scalar
        c2 = (jnp.sum(beta * wo_row) + bo.reshape(())).reshape(1, 1)
        operands = (x, w1b, b1, w2b, b2, w3b, b3, gw, c1, c2)
        in_specs = mlp_specs + [resident(gw), resident(c1), resident(c2)]
        kernel = _dnn_kernel_ln
    else:
        wo_b = wo.astype(jnp.bfloat16)
        bo_f = bo.reshape(1, out_features).astype(jnp.float32)
        operands = (x, w1b, b1, w2b, b2, w3b, b3, wo_b, bo_f)
        in_specs = mlp_specs + [resident(wo_b), resident(bo_f)]
        kernel = _dnn_kernel_mm

    out_shape = jax.ShapeDtypeStruct((B, out_features), jnp.float32)
    out_spec = pl.BlockSpec((TB, out_features), lambda i: (i, 0))

    flops = 2 * B * (in_f * in_f + in_f * emb + emb * emb + emb * out_features)
    bytes_accessed = (x.size * x.dtype.itemsize
                      + sum(int(a.size) * a.dtype.itemsize for a in operands[1:])
                      + B * out_features * 4)
    cost = pl.CostEstimate(flops=flops,
                           transcendentals=B if use_layernorm else 0,
                           bytes_accessed=int(bytes_accessed))

    return pl.pallas_call(
        kernel,
        out_shape=out_shape,
        grid=(G,),
        in_specs=in_specs,
        out_specs=out_spec,
        compiler_params=pltpu.CompilerParams(
            dimension_semantics=("parallel",),
            vmem_limit_bytes=32 << 20),
        cost_estimate=cost,
    )(*operands)


def init_params(key, in_features, emb_dim, out_features):
    """Deterministic init matching _init_weights: N(0, 0.02) weights, zero bias."""
    ks = jax.random.split(key, 4)
    std = 0.02
    # weights stored as (in, out)  (transposed vs. torch's (out, in))
    w1 = std * jax.random.normal(ks[0], (in_features, in_features), jnp.float32)
    b1 = jnp.zeros((1, in_features), jnp.float32)
    w2 = std * jax.random.normal(ks[1], (in_features, emb_dim), jnp.float32)
    b2 = jnp.zeros((1, emb_dim), jnp.float32)
    w3 = std * jax.random.normal(ks[2], (emb_dim, emb_dim), jnp.float32)
    b3 = jnp.zeros((1, emb_dim), jnp.float32)
    gamma = jnp.ones((1, emb_dim), jnp.float32)     # LayerNorm weight
    beta = jnp.zeros((1, emb_dim), jnp.float32)     # LayerNorm bias
    wo = std * jax.random.normal(ks[3], (emb_dim, out_features), jnp.float32)
    bo = jnp.zeros((1, out_features), jnp.float32)
    return (w1, b1, w2, b2, w3, b3, gamma, beta, wo, bo)


def dnn_reference(x, params, out_features):
    """Pure-JAX f32 reference for correctness check."""
    w1, b1, w2, b2, w3, b3, gamma, beta, wo, bo = params
    h = jnp.maximum(x @ w1 + b1, 0.0)
    h = jnp.maximum(h @ w2 + b2, 0.0)
    h = jnp.maximum(h @ w3 + b3, 0.0)
    if out_features == 1:
        mean = jnp.mean(h, axis=-1, keepdims=True)
        var = jnp.mean((h - mean) ** 2, axis=-1, keepdims=True)
        h = (h - mean) / jnp.sqrt(var + 1e-5) * gamma + beta
    return h @ wo + bo


if __name__ == "__main__":
    # Small shapes consistent with the module: batch=24, in_features=128,
    # emb_dim=256.  Two cases:
    #   - out_features=1 with block_batch=16: exercises the fused LayerNorm /
    #     fc_out reduction path, a 2-step grid and a ragged final block.
    #   - out_features=4 with default tiling: exercises the plain fc_out matmul
    #     path with a single full-extent tile.
    B, IN_F, EMB = 24, 128, 256

    key = jax.random.PRNGKey(0)
    kx, kp = jax.random.split(key)
    x = jax.random.normal(kx, (B, IN_F), jnp.float32)

    # Reference uses the same bf16-rounded matmul operands the kernel consumes
    # (weight/input quantization excluded from the tolerance budget).
    def q(a):
        return a.astype(jnp.bfloat16).astype(jnp.float32)

    for out_f, bb in ((1, 16), (4, None)):
        params = init_params(kp, IN_F, EMB, out_f)
        y = jax.block_until_ready(dnn_forward(x, params, out_f, block_batch=bb))

        w1, b1, w2, b2, w3, b3, gamma, beta, wo, bo = params
        wo_ref = wo if out_f == 1 else q(wo)   # LN path keeps fc_out weights f32
        ref_params = (q(w1), b1, q(w2), b2, q(w3), b3, gamma, beta, wo_ref, bo)
        y_ref = dnn_reference(q(x), ref_params, out_f)

        assert y.shape == (B, out_f)
        assert bool(jnp.allclose(y, y_ref, atol=2.5e-2, rtol=2.5e-2)), \
            f"mismatch vs reference (out_features={out_f})"

    print("KERNEL_OK")
</pallas_src>

<mosaic_0001>
module attributes {stable_mosaic.version = 11 : i64} {
  func.func @_dnn_kernel_ln(%arg0: i32, %arg1: memref<16x128xf32, #tpu.memory_space<vmem>>, %arg2: memref<128x128xbf16, #tpu.memory_space<vmem>>, %arg3: memref<1x128xf32, #tpu.memory_space<vmem>>, %arg4: memref<128x256xbf16, #tpu.memory_space<vmem>>, %arg5: memref<1x256xf32, #tpu.memory_space<vmem>>, %arg6: memref<256x256xbf16, #tpu.memory_space<vmem>>, %arg7: memref<1x256xf32, #tpu.memory_space<vmem>>, %arg8: memref<1x256xf32, #tpu.memory_space<vmem>>, %arg9: memref<1x1xf32, #tpu.memory_space<vmem>>, %arg10: memref<1x1xf32, #tpu.memory_space<vmem>>, %arg11: memref<16x1xf32, #tpu.memory_space<vmem>>) attributes {dimension_semantics = [#tpu.dimension_semantics<parallel>], iteration_bounds = array<i64: 2>, scalar_prefetch = 0 : i64, scratch_operands = 0 : i64, tpu.core_type = #tpu.core_type<tc>, window_params = [{transform_indices = @transform_0, window_bounds = array<i64: 16, 128>}, {pipeline_mode = #tpu.pipeline_mode<synchronous>, transform_indices = @transform_1, window_bounds = array<i64: 128, 128>}, {pipeline_mode = #tpu.pipeline_mode<synchronous>, transform_indices = @transform_2, window_bounds = array<i64: 1, 128>}, {pipeline_mode = #tpu.pipeline_mode<synchronous>, transform_indices = @transform_3, window_bounds = array<i64: 128, 256>}, {pipeline_mode = #tpu.pipeline_mode<synchronous>, transform_indices = @transform_4, window_bounds = array<i64: 1, 256>}, {pipeline_mode = #tpu.pipeline_mode<synchronous>, transform_indices = @transform_5, window_bounds = array<i64: 256, 256>}, {pipeline_mode = #tpu.pipeline_mode<synchronous>, transform_indices = @transform_6, window_bounds = array<i64: 1, 256>}, {pipeline_mode = #tpu.pipeline_mode<synchronous>, transform_indices = @transform_7, window_bounds = array<i64: 1, 256>}, {pipeline_mode = #tpu.pipeline_mode<synchronous>, transform_indices = @transform_8, window_bounds = array<i64: 1, 1>}, {pipeline_mode = #tpu.pipeline_mode<synchronous>, transform_indices = @transform_9, window_bounds = array<i64: 1, 1>}, {transform_indices = @transform_10, window_bounds = array<i64: 16, 1>}]} {
    %c0 = arith.constant 0 : index
    %c0_0 = arith.constant 0 : index
    %0 = vector.load %arg1[%c0, %c0_0] : memref<16x128xf32, #tpu.memory_space<vmem>>, vector<16x128xf32>
    %1 = arith.truncf %0 : vector<16x128xf32> to vector<16x128xbf16>
    %c0_1 = arith.constant 0 : index
    %c0_2 = arith.constant 0 : index
    %2 = vector.load %arg2[%c0_1, %c0_2] : memref<128x128xbf16, #tpu.memory_space<vmem>>, vector<128x128xbf16>
    %cst = arith.constant dense<0.000000e+00> : vector<16x128xf32>
    %3 = tpu.matmul %1, %2, %cst {dimension_numbers = #tpu.dot_dimension_numbers<[1], [0], [0], [1], [0, 0, 1, 1], [], []>} : vector<16x128xbf16>, vector<128x128xbf16>, vector<16x128xf32> -> vector<16x128xf32>
    %c0_3 = arith.constant 0 : index
    %c0_4 = arith.constant 0 : index
    %4 = vector.load %arg3[%c0_3, %c0_4] : memref<1x128xf32, #tpu.memory_space<vmem>>, vector<1x128xf32>
    %5 = vector.broadcast %4 : vector<1x128xf32> to vector<16x128xf32>
    %6 = arith.addf %3, %5 : vector<16x128xf32>
    %7 = arith.truncf %6 : vector<16x128xf32> to vector<16x128xbf16>
    %cst_5 = arith.constant 0.000000e+00 : bf16
    %8 = vector.broadcast %cst_5 : bf16 to vector<16x128xbf16>
    %9 = arith.maximumf %7, %8 : vector<16x128xbf16>
    %c0_6 = arith.constant 0 : index
    %c0_7 = arith.constant 0 : index
    %10 = vector.load %arg4[%c0_6, %c0_7] : memref<128x256xbf16, #tpu.memory_space<vmem>>, vector<128x256xbf16>
    %cst_8 = arith.constant dense<0.000000e+00> : vector<16x256xf32>
    %11 = tpu.matmul %9, %10, %cst_8 {dimension_numbers = #tpu.dot_dimension_numbers<[1], [0], [0], [1], [0, 0, 1, 1], [], []>} : vector<16x128xbf16>, vector<128x256xbf16>, vector<16x256xf32> -> vector<16x256xf32>
    %c0_9 = arith.constant 0 : index
    %c0_10 = arith.constant 0 : index
    %12 = vector.load %arg5[%c0_9, %c0_10] : memref<1x256xf32, #tpu.memory_space<vmem>>, vector<1x256xf32>
    %13 = vector.broadcast %12 : vector<1x256xf32> to vector<16x256xf32>
    %14 = arith.addf %11, %13 : vector<16x256xf32>
    %15 = arith.truncf %14 : vector<16x256xf32> to vector<16x256xbf16>
    %cst_11 = arith.constant 0.000000e+00 : bf16
    %16 = vector.broadcast %cst_11 : bf16 to vector<16x256xbf16>
    %17 = arith.maximumf %15, %16 : vector<16x256xbf16>
    %c0_12 = arith.constant 0 : index
    %c0_13 = arith.constant 0 : index
    %18 = vector.load %arg6[%c0_12, %c0_13] : memref<256x256xbf16, #tpu.memory_space<vmem>>, vector<256x256xbf16>
    %cst_14 = arith.constant dense<0.000000e+00> : vector<16x256xf32>
    %19 = tpu.matmul %17, %18, %cst_14 {dimension_numbers = #tpu.dot_dimension_numbers<[1], [0], [0], [1], [0, 0, 1, 1], [], []>} : vector<16x256xbf16>, vector<256x256xbf16>, vector<16x256xf32> -> vector<16x256xf32>
    %c0_15 = arith.constant 0 : index
    %c0_16 = arith.constant 0 : index
    %20 = vector.load %arg7[%c0_15, %c0_16] : memref<1x256xf32, #tpu.memory_space<vmem>>, vector<1x256xf32>
    %21 = vector.broadcast %20 : vector<1x256xf32> to vector<16x256xf32>
    %22 = arith.addf %19, %21 : vector<16x256xf32>
    %cst_17 = arith.constant 0.000000e+00 : f32
    %23 = vector.broadcast %cst_17 : f32 to vector<16x256xf32>
    %24 = arith.maximumf %22, %23 : vector<16x256xf32>
    %cst_18 = arith.constant dense<0.000000e+00> : vector<16xf32>
    %25 = vector.multi_reduction <add>, %24, %cst_18 [1] : vector<16x256xf32> to vector<16xf32>
    %26 = vector.shape_cast %25 : vector<16xf32> to vector<16x1xf32>
    %cst_19 = arith.constant 3.906250e-03 : f32
    %27 = vector.broadcast %cst_19 : f32 to vector<16x1xf32>
    %28 = arith.mulf %26, %27 : vector<16x1xf32>
    %29 = arith.mulf %24, %24 : vector<16x256xf32>
    %cst_20 = arith.constant dense<0.000000e+00> : vector<16xf32>
    %30 = vector.multi_reduction <add>, %29, %cst_20 [1] : vector<16x256xf32> to vector<16xf32>
    %31 = vector.shape_cast %30 : vector<16xf32> to vector<16x1xf32>
    %cst_21 = arith.constant 3.906250e-03 : f32
    %32 = vector.broadcast %cst_21 : f32 to vector<16x1xf32>
    %33 = arith.mulf %31, %32 : vector<16x1xf32>
    %34 = arith.mulf %28, %28 : vector<16x1xf32>
    %35 = arith.subf %33, %34 : vector<16x1xf32>
    %cst_22 = arith.constant 0.000000e+00 : f32
    %36 = vector.broadcast %cst_22 : f32 to vector<16x1xf32>
    %37 = arith.maximumf %35, %36 : vector<16x1xf32>
    %c0_23 = arith.constant 0 : index
    %c0_24 = arith.constant 0 : index
    %38 = vector.load %arg8[%c0_23, %c0_24] : memref<1x256xf32, #tpu.memory_space<vmem>>, vector<1x256xf32>
    %39 = vector.broadcast %38 : vector<1x256xf32> to vector<16x256xf32>
    %40 = arith.mulf %24, %39 : vector<16x256xf32>
    %cst_25 = arith.constant dense<0.000000e+00> : vector<16xf32>
    %41 = vector.multi_reduction <add>, %40, %cst_25 [1] : vector<16x256xf32> to vector<16xf32>
    %42 = vector.shape_cast %41 : vector<16xf32> to vector<16x1xf32>
    %cst_26 = arith.constant 9.99999974E-6 : f32
    %43 = vector.broadcast %cst_26 : f32 to vector<16x1xf32>
    %44 = arith.addf %37, %43 : vector<16x1xf32>
    %45 = math.rsqrt %44 : vector<16x1xf32>
    %c0_27 = arith.constant 0 : index
    %c0_28 = arith.constant 0 : index
    %46 = vector.load %arg9[%c0_27, %c0_28] : memref<1x1xf32, #tpu.memory_space<vmem>>, vector<1x1xf32>
    %47 = vector.broadcast %46 : vector<1x1xf32> to vector<16x1xf32>
    %48 = arith.mulf %28, %47 : vector<16x1xf32>
    %49 = arith.subf %42, %48 : vector<16x1xf32>
    %50 = arith.mulf %45, %49 : vector<16x1xf32>
    %c0_29 = arith.constant 0 : index
    %c0_30 = arith.constant 0 : index
    %51 = vector.load %arg10[%c0_29, %c0_30] : memref<1x1xf32, #tpu.memory_space<vmem>>, vector<1x1xf32>
    %52 = vector.broadcast %51 : vector<1x1xf32> to vector<16x1xf32>
    %53 = arith.addf %50, %52 : vector<16x1xf32>
    %c0_31 = arith.constant 0 : index
    %c0_32 = arith.constant 0 : index
    %54 = vector.load %arg11[%c0_31, %c0_32] : memref<16x1xf32, #tpu.memory_space<vmem>>, vector<16x1xf32>
    tpu.vector_store %arg11[%c0_31, %c0_32], %53 {strides = array<i32>} : memref<16x1xf32, #tpu.memory_space<vmem>>, vector<16x1xf32>,
    return
  }
  func.func @transform_0(%arg0: i32) -> (i32, i32) {
    %c0_i32 = arith.constant 0 : i32
    %c0_i32_0 = arith.constant 0 : i32
    return %arg0, %c0_i32 : i32, i32
  }
  func.func @transform_1(%arg0: i32) -> (i32, i32) {
    %c0_i32 = arith.constant 0 : i32
    %c0_i32_0 = arith.constant 0 : i32
    %c0_i32_1 = arith.constant 0 : i32
    return %c0_i32, %c0_i32_0 : i32, i32
  }
  func.func @transform_2(%arg0: i32) -> (i32, i32) {
    %c0_i32 = arith.constant 0 : i32
    %c0_i32_0 = arith.constant 0 : i32
    %c0_i32_1 = arith.constant 0 : i32
    return %c0_i32, %c0_i32_0 : i32, i32
  }
  func.func @transform_3(%arg0: i32) -> (i32, i32) {
    %c0_i32 = arith.constant 0 : i32
    %c0_i32_0 = arith.constant 0 : i32
    %c0_i32_1 = arith.constant 0 : i32
    return %c0_i32, %c0_i32_0 : i32, i32
  }
  func.func @transform_4(%arg0: i32) -> (i32, i32) {
    %c0_i32 = arith.constant 0 : i32
    %c0_i32_0 = arith.constant 0 : i32
    %c0_i32_1 = arith.constant 0 : i32
    return %c0_i32, %c0_i32_0 : i32, i32
  }
  func.func @transform_5(%arg0: i32) -> (i32, i32) {
    %c0_i32 = arith.constant 0 : i32
    %c0_i32_0 = arith.constant 0 : i32
    %c0_i32_1 = arith.constant 0 : i32
    return %c0_i32, %c0_i32_0 : i32, i32
  }
  func.func @transform_6(%arg0: i32) -> (i32, i32) {
    %c0_i32 = arith.constant 0 : i32
    %c0_i32_0 = arith.constant 0 : i32
    %c0_i32_1 = arith.constant 0 : i32
    return %c0_i32, %c0_i32_0 : i32, i32
  }
  func.func @transform_7(%arg0: i32) -> (i32, i32) {
    %c0_i32 = arith.constant 0 : i32
    %c0_i32_0 = arith.constant 0 : i32
    %c0_i32_1 = arith.constant 0 : i32
    return %c0_i32, %c0_i32_0 : i32, i32
  }
  func.func @transform_8(%arg0: i32) -> (i32, i32) {
    %c0_i32 = arith.constant 0 : i32
    %c0_i32_0 = arith.constant 0 : i32
    %c0_i32_1 = arith.constant 0 : i32
    return %c0_i32, %c0_i32_0 : i32, i32
  }
  func.func @transform_9(%arg0: i32) -> (i32, i32) {
    %c0_i32 = arith.constant 0 : i32
    %c0_i32_0 = arith.constant 0 : i32
    %c0_i32_1 = arith.constant 0 : i32
    return %c0_i32, %c0_i32_0 : i32, i32
  }
  func.func @transform_10(%arg0: i32) -> (i32, i32) {
    %c0_i32 = arith.constant 0 : i32
    %c0_i32_0 = arith.constant 0 : i32
    return %arg0, %c0_i32 : i32, i32
  }
}

</mosaic_0001>

<llo_original>
// kernel: tpu_custom_call.1
$region0: #{tpu_custom_call.1}
  #allocation0 [shape = 'u32[]', space=smem, size = 0x4, offset = 0x4, fixed_abs, tag = 'smem constant byte address 0x4 - core index']
  #allocation1 [shape = 'u32[144,128]{1,0:T(1,128)}', space=vmem, size = 0x12000, scoped, tag = 'internal scratch']
  #allocation2 [shape = 'f32[1,1]{1,0:T(1,128)S(1)}', space=vmem, size = 0x200, scoped, tag = 'scoped memory for tpu_custom_call.1']
  #allocation3 [shape = 'f32[1,1]{1,0:T(1,128)S(1)}', space=vmem, size = 0x200, scoped, tag = 'scoped memory for tpu_custom_call.1']
  %s0 = inlined_call_operand.hbm [shape: f32[24,128], index: 0, kind: input, shape index: {}]
  %s1 = inlined_call_operand.hbm [shape: bf16[128,128], index: 1, kind: input, shape index: {}]
  %s2 = inlined_call_operand.vmem [shape: f32[1,128], index: 2, kind: input, shape index: {}]
  %s3 = inlined_call_operand.hbm [shape: bf16[128,256], index: 3, kind: input, shape index: {}]
  %s4 = inlined_call_operand.vmem [shape: f32[1,256], index: 4, kind: input, shape index: {}]
  %s5 = inlined_call_operand.hbm [shape: bf16[256,256], index: 5, kind: input, shape index: {}]
  %s6 = inlined_call_operand.vmem [shape: f32[1,256], index: 6, kind: input, shape index: {}]
  %s7 = inlined_call_operand.vmem [shape: f32[1,256], index: 7, kind: input, shape index: {}]
  %s8 = inlined_call_operand.<no memory space> [shape: f32[1,1], index: 8, kind: input, shape index: {}]
  %s9 = inlined_call_operand.<no memory space> [shape: f32[1,1], index: 9, kind: input, shape index: {}]
  %s10 = inlined_call_operand.vmem [shape: f32[24,1], index: 10, kind: output, shape index: {}]
  %s11 = sld [smem:[#allocation0]]
  $region137: #{tpu_custom_call.1} parent=0
    _
  %s13 = ssub.s32 1, %s11
  %s14 = scalar_select 0, %s13, %s11
  %v15 = vstv %s8
  %16 = vst [vmem:[#allocation2] sm:$0x1] %v15
  %v17 = vstv %s9
  %18 = vst [vmem:[#allocation3] sm:$0x1] %v17
  $region1: #{tpu_custom_call.1} parent=0
    #allocation4 [shape = 'u8[16384]{0}', space=vmem, size = 0x4000, scoped, tag = 'input window, operand 0']
    #allocation5 [shape = 's32[2]{0}', space=sflag, size = 0x8, scoped, tag = 'scoped memory for tpu_custom_call.1']
    #allocation6 [shape = 'u8[32768]{0}', space=vmem, size = 0x8000, scoped, tag = 'input window, operand 1, single buffered']
    #allocation7 [shape = 's32[1]{0}', space=sflag, size = 0x4, scoped, tag = 'scoped memory for tpu_custom_call.1']
    #allocation8 [shape = 'u8[65536]{0}', space=vmem, size = 0x10000, scoped, tag = 'input window, operand 3, single buffered']
    #allocation9 [shape = 'u8[131072]{0}', space=vmem, size = 0x20000, scoped, tag = 'input window, operand 5, single buffered']
    #allocation10 [shape = 's32[1]{0}', space=sflag, size = 0x4, scoped, tag = 'scoped memory for tpu_custom_call.1']
    #allocation11 [shape = 'u8[16384]{0}', space=vmem, size = 0x4000, scoped, tag = 'output window, operand 0']
    %19 = vsyncpa [#allocation5], 0
    %s20 = scalar_lea.sflag [#allocation5], 1
    %21 = vsyncpa %s20, 0
    %22 = vsyncpa [#allocation7], 0
    %23 = vsyncpa [#allocation10], 0
    loop: start=0, step=1, limit=4
    $region2: #{tpu_custom_call.1} parent=1 // loop_pre_header
      _
    $region3: #{tpu_custom_call.1} parent=1 // loop_header
      %s25 = sphi 0, %s29
      %p26 = scmp.ge.s32.totalorder %s25, 4
      %s35 = sphi 0, %s37
      %s38 = sphi 0, %s35
      %s39 = sphi 0, %s38
      %s55 = sphi 0, %s39
      %s59 = sphi 0, %s59
      %s61 = sphi 0, %s59
      %s62 = sphi 0, %s61
      %s76 = sphi 0, %s62
      %s80 = sphi 0, %s80
      %s82 = sphi 0, %s80
      %s83 = sphi 0, %s82
      %s97 = sphi 0, %s83
      %s101 = sphi 0, %s101
      %s103 = sphi 0, %s101
      %s104 = sphi 0, %s103
      %s118 = sphi 0, %s104
      %s122 = sphi 0, %s122
      %s124 = sphi 0, %s122
      %s125 = sphi 0, %s124
      %s139 = sphi 0, %s125
      %s143 = sphi 0, %s143
      %s145 = sphi 0, %s143
      %s146 = sphi 0, %s145
      %s160 = sphi 0, %s146
      %s164 = sphi 0, %s164
      %s166 = sphi 0, %s164
      %s167 = sphi 0, %s166
      %s181 = sphi 0, %s167
      %s185 = sphi 0, %s185
      %s187 = sphi 0, %s185
      %s188 = sphi 0, %s187
      %s202 = sphi 0, %s188
      %s206 = sphi 0, %s206
      %s208 = sphi 0, %s206
      %s209 = sphi 0, %s208
      %s223 = sphi 0, %s209
      %s227 = sphi 0, %s227
      %s229 = sphi 0, %s227
      %s230 = sphi 0, %s229
      %s244 = sphi 0, %s230
      %s250 = sphi 0, %s252
      %s253 = sphi 0, %s250
      %s254 = sphi 0, %s253
      %s270 = sphi 0, %s254
    $region4: #{tpu_custom_call.1} parent=1 // loop_header_branch
      %28 = sbr.rel (%p26) target = $region8
    $region5: #{tpu_custom_call.1} parent=1 // loop_body
      %s30 = ssub.s32 %s25, 1
      %s31 = ssub.s32 %s25, 2
      %s32 = sadd.s32 %s25, 1
      %s33 = ssub.s32 %s25, %s32
      %p34 = scmp.eq.s32.totalorder %s33, 0
      %s36 = sadd.s32 %s35, 1
      %s37 = scalar_select %p34, %s35, %s36
      %p40 = pneg %p34
      %p41 = scmp.eq.s32.totalorder %s25, 1
      %p42 = por %p40, %p41
      %p43 = scmp.ne.s32.totalorder %s35, %s38
      %p44 = scmp.eq.s32.totalorder %s25, 0
      %p45 = por %p43, %p44
      %p46 = scmp.ne.s32.totalorder %s35, %s38
      %p47 = scmp.eq.s32.totalorder %s30, 1
      %p48 = por %p46, %p47
      %p49 = scmp.ne.s32.totalorder %s38, %s39
      %p50 = scmp.eq.s32.totalorder %s30, 0
      %p51 = por %p49, %p50
      %p52 = scmp.ne.s32.totalorder %s38, %s39
      %p53 = scmp.eq.s32.totalorder %s31, 1
      %p54 = por %p52, %p53
      %p56 = scmp.ne.s32.totalorder %s39, %s55
      %p57 = scmp.eq.s32.totalorder %s31, 0
      %p58 = por %p56, %p57
      %s60 = sadd.s32 %s59, 1
      %p63 = scmp.eq.s32.totalorder %s25, 1
      %p64 = scmp.ne.s32.totalorder %s59, %s61
      %p65 = scmp.eq.s32.totalorder %s25, 0
      %p66 = por %p64, %p65
      %p67 = scmp.ne.s32.totalorder %s59, %s61
      %p68 = scmp.eq.s32.totalorder %s30, 1
      %p69 = por %p67, %p68
      %p70 = scmp.ne.s32.totalorder %s61, %s62
      %p71 = scmp.eq.s32.totalorder %s30, 0
      %p72 = por %p70, %p71
      %p73 = scmp.ne.s32.totalorder %s61, %s62
      %p74 = scmp.eq.s32.totalorder %s31, 1
      %p75 = por %p73, %p74
      %p77 = scmp.ne.s32.totalorder %s62, %s76
      %p78 = scmp.eq.s32.totalorder %s31, 0
      %p79 = por %p77, %p78
      %s81 = sadd.s32 %s80, 1
      %p84 = scmp.eq.s32.totalorder %s25, 1
      %p85 = scmp.ne.s32.totalorder %s80, %s82
      %p86 = scmp.eq.s32.totalorder %s25, 0
      %p87 = por %p85, %p86
      %p88 = scmp.ne.s32.totalorder %s80, %s82
      %p89 = scmp.eq.s32.totalorder %s30, 1
      %p90 = por %p88, %p89
      %p91 = scmp.ne.s32.totalorder %s82, %s83
      %p92 = scmp.eq.s32.totalorder %s30, 0
      %p93 = por %p91, %p92
      %p94 = scmp.ne.s32.totalorder %s82, %s83
      %p95 = scmp.eq.s32.totalorder %s31, 1
      %p96 = por %p94, %p95
      %p98 = scmp.ne.s32.totalorder %s83, %s97
      %p99 = scmp.eq.s32.totalorder %s31, 0
      %p100 = por %p98, %p99
      %s102 = sadd.s32 %s101, 1
      %p105 = scmp.eq.s32.totalorder %s25, 1
      %p106 = scmp.ne.s32.totalorder %s101, %s103
      %p107 = scmp.eq.s32.totalorder %s25, 0
      %p108 = por %p106, %p107
      %p109 = scmp.ne.s32.totalorder %s101, %s103
      %p110 = scmp.eq.s32.totalorder %s30, 1
      %p111 = por %p109, %p110
      %p112 = scmp.ne.s32.totalorder %s103, %s104
      %p113 = scmp.eq.s32.totalorder %s30, 0
      %p114 = por %p112, %p113
      %p115 = scmp.ne.s32.totalorder %s103, %s104
      %p116 = scmp.eq.s32.totalorder %s31, 1
      %p117 = por %p115, %p116
      %p119 = scmp.ne.s32.totalorder %s104, %s118
      %p120 = scmp.eq.s32.totalorder %s31, 0
      %p121 = por %p119, %p120
      %s123 = sadd.s32 %s122, 1
      %p126 = scmp.eq.s32.totalorder %s25, 1
      %p127 = scmp.ne.s32.totalorder %s122, %s124
      %p128 = scmp.eq.s32.totalorder %s25, 0
      %p129 = por %p127, %p128
      %p130 = scmp.ne.s32.totalorder %s122, %s124
      %p131 = scmp.eq.s32.totalorder %s30, 1
      %p132 = por %p130, %p131
      %p133 = scmp.ne.s32.totalorder %s124, %s125
      %p134 = scmp.eq.s32.totalorder %s30, 0
      %p135 = por %p133, %p134
      %p136 = scmp.ne.s32.totalorder %s124, %s125
      %p137 = scmp.eq.s32.totalorder %s31, 1
      %p138 = por %p136, %p137
      %p140 = scmp.ne.s32.totalorder %s125, %s139
      %p141 = scmp.eq.s32.totalorder %s31, 0
      %p142 = por %p140, %p141
      %s144 = sadd.s32 %s143, 1
      %p147 = scmp.eq.s32.totalorder %s25, 1
      %p148 = scmp.ne.s32.totalorder %s143, %s145
      %p149 = scmp.eq.s32.totalorder %s25, 0
      %p150 = por %p148, %p149
      %p151 = scmp.ne.s32.totalorder %s143, %s145
      %p152 = scmp.eq.s32.totalorder %s30, 1
      %p153 = por %p151, %p152
      %p154 = scmp.ne.s32.totalorder %s145, %s146
      %p155 = scmp.eq.s32.totalorder %s30, 0
      %p156 = por %p154, %p155
      %p157 = scmp.ne.s32.totalorder %s145, %s146
      %p158 = scmp.eq.s32.totalorder %s31, 1
      %p159 = por %p157, %p158
      %p161 = scmp.ne.s32.totalorder %s146, %s160
      %p162 = scmp.eq.s32.totalorder %s31, 0
      %p163 = por %p161, %p162
      %s165 = sadd.s32 %s164, 1
      %p168 = scmp.eq.s32.totalorder %s25, 1
      %p169 = scmp.ne.s32.totalorder %s164, %s166
      %p170 = scmp.eq.s32.totalorder %s25, 0
      %p171 = por %p169, %p170
      %p172 = scmp.ne.s32.totalorder %s164, %s166
      %p173 = scmp.eq.s32.totalorder %s30, 1
      %p174 = por %p172, %p173
      %p175 = scmp.ne.s32.totalorder %s166, %s167
      %p176 = scmp.eq.s32.totalorder %s30, 0
      %p177 = por %p175, %p176
      %p178 = scmp.ne.s32.totalorder %s166, %s167
      %p179 = scmp.eq.s32.totalorder %s31, 1
      %p180 = por %p178, %p179
      %p182 = scmp.ne.s32.totalorder %s167, %s181
      %p183 = scmp.eq.s32.totalorder %s31, 0
      %p184 = por %p182, %p183
      %s186 = sadd.s32 %s185, 1
      %p189 = scmp.eq.s32.totalorder %s25, 1
      %p190 = scmp.ne.s32.totalorder %s185, %s187
      %p191 = scmp.eq.s32.totalorder %s25, 0
      %p192 = por %p190, %p191
      %p193 = scmp.ne.s32.totalorder %s185, %s187
      %p194 = scmp.eq.s32.totalorder %s30, 1
      %p195 = por %p193, %p194
      %p196 = scmp.ne.s32.totalorder %s187, %s188
      %p197 = scmp.eq.s32.totalorder %s30, 0
      %p198 = por %p196, %p197
      %p199 = scmp.ne.s32.totalorder %s187, %s188
      %p200 = scmp.eq.s32.totalorder %s31, 1
      %p201 = por %p199, %p200
      %p203 = scmp.ne.s32.totalorder %s188, %s202
      %p204 = scmp.eq.s32.totalorder %s31, 0
      %p205 = por %p203, %p204
      %s207 = sadd.s32 %s206, 1
      %p210 = scmp.eq.s32.totalorder %s25, 1
      %p211 = scmp.ne.s32.totalorder %s206, %s208
      %p212 = scmp.eq.s32.totalorder %s25, 0
      %p213 = por %p211, %p212
      %p214 = scmp.ne.s32.totalorder %s206, %s208
      %p215 = scmp.eq.s32.totalorder %s30, 1
      %p216 = por %p214, %p215
      %p217 = scmp.ne.s32.totalorder %s208, %s209
      %p218 = scmp.eq.s32.totalorder %s30, 0
      %p219 = por %p217, %p218
      %p220 = scmp.ne.s32.totalorder %s208, %s209
      %p221 = scmp.eq.s32.totalorder %s31, 1
      %p222 = por %p220, %p221
      %p224 = scmp.ne.s32.totalorder %s209, %s223
      %p225 = scmp.eq.s32.totalorder %s31, 0
      %p226 = por %p224, %p225
      %s228 = sadd.s32 %s227, 1
      %p231 = scmp.eq.s32.totalorder %s25, 1
      %p232 = scmp.ne.s32.totalorder %s227, %s229
      %p233 = scmp.eq.s32.totalorder %s25, 0
      %p234 = por %p232, %p233
      %p235 = scmp.ne.s32.totalorder %s227, %s229
      %p236 = scmp.eq.s32.totalorder %s30, 1
      %p237 = por %p235, %p236
      %p238 = scmp.ne.s32.totalorder %s229, %s230
      %p239 = scmp.eq.s32.totalorder %s30, 0
      %p240 = por %p238, %p239
      %p241 = scmp.ne.s32.totalorder %s229, %s230
      %p242 = scmp.eq.s32.totalorder %s31, 1
      %p243 = por %p241, %p242
      %p245 = scmp.ne.s32.totalorder %s230, %s244
      %p246 = scmp.eq.s32.totalorder %s31, 0
      %p247 = por %p245, %p246
      %s248 = ssub.s32 %s25, %s32
      %p249 = scmp.eq.s32.totalorder %s248, 0
      %s251 = sadd.s32 %s250, 1
      %s252 = scalar_select %p249, %s250, %s251
      %p255 = pneg %p249
      %p256 = scmp.eq.s32.totalorder %s25, 1
      %p257 = por %p255, %p256
      %p258 = scmp.ne.s32.totalorder %s250, %s253
      %p259 = scmp.eq.s32.totalorder %s25, 0
      %p260 = por %p258, %p259
      %p261 = scmp.ne.s32.totalorder %s250, %s253
      %p262 = scmp.eq.s32.totalorder %s30, 1
      %p263 = por %p261, %p262
      %p264 = scmp.ne.s32.totalorder %s253, %s254
      %p265 = scmp.eq.s32.totalorder %s30, 0
      %p266 = por %p264, %p265
      %p267 = scmp.ne.s32.totalorder %s253, %s254
      %p268 = scmp.eq.s32.totalorder %s31, 1
      %p269 = por %p267, %p268
      %p271 = scmp.ne.s32.totalorder %s254, %s270
      %p272 = scmp.eq.s32.totalorder %s31, 0
      %p273 = por %p271, %p272
      %p274 = scmp.le.s32.totalorder 1, %s25
      %p275 = scmp.lt.s32.totalorder %s25, 3
      %p276 = pnand %p274, %p275
      %p277 = pneg %p276
      // Predicated region
      $region9: #{tpu_custom_call.1} parent=5 // pred_check
        _
      $region10: #{tpu_custom_call.1} parent=5 // pred_check_branch
        %279 = sbr.rel (%p276) target = $region12
      $region11: #{tpu_custom_call.1} parent=5 // pred_region
        %s280 = ssub.s32 %s25, 1
        // Predicated region
        $region13: #{tpu_custom_call.1} parent=11 // pred_check
          %p281 = pneg %p72
        $region14: #{tpu_custom_call.1} parent=11 // pred_check_branch
          %283 = sbr.rel (%p281) target = $region16
        $region15: #{tpu_custom_call.1} parent=11 // pred_region
          %s285 = ssub.s32 1024, 1024
          %286 = vsyncadd [#allocation7], %s285
          %s287 = sshll.u32 [#allocation6], 4
          %s288 = int_to_ptr.vmem [resolvable:$true] %s287
          %293 = dma.hbm_to_vmem [thread:$0]  %s1, 1024, %s288, [#allocation7], 64, 64, 4
        $region16: #{tpu_custom_call.1} parent=11 // pred_fallthru
          _
        // Predicated region
        $region17: #{tpu_custom_call.1} parent=11 // pred_check
          %p294 = pneg %p93
        $region18: #{tpu_custom_call.1} parent=11 // pred_check_branch
          %296 = sbr.rel (%p294) target = $region20
        $region19: #{tpu_custom_call.1} parent=11 // pred_region
          _
        $region20: #{tpu_custom_call.1} parent=11 // pred_fallthru
          _
        // Predicated region
        $region21: #{tpu_custom_call.1} parent=11 // pred_check
          %p297 = pneg %p114
        $region22: #{tpu_custom_call.1} parent=11 // pred_check_branch
          %299 = sbr.rel (%p297) target = $region24
        $region23: #{tpu_custom_call.1} parent=11 // pred_region
          %s301 = ssub.s32 2048, 2048
          %302 = vsyncadd [#allocation7], %s301
          %s303 = sshll.u32 [#allocation8], 4
          %s304 = int_to_ptr.vmem [resolvable:$true] %s303
          %309 = dma.hbm_to_vmem [thread:$0]  %s3, 2048, %s304, [#allocation7], 128, 128, 8
        $region24: #{tpu_custom_call.1} parent=11 // pred_fallthru
          _
        // Predicated region
        $region25: #{tpu_custom_call.1} parent=11 // pred_check
          %p310 = pneg %p135
        $region26: #{tpu_custom_call.1} parent=11 // pred_check_branch
          %312 = sbr.rel (%p310) target = $region28
        $region27: #{tpu_custom_call.1} parent=11 // pred_region
          _
        $region28: #{tpu_custom_call.1} parent=11 // pred_fallthru
          _
        // Predicated region
        $region29: #{tpu_custom_call.1} parent=11 // pred_check
          %p313 = pneg %p156
        $region30: #{tpu_custom_call.1} parent=11 // pred_check_branch
          %315 = sbr.rel (%p313) target = $region32
        $region31: #{tpu_custom_call.1} parent=11 // pred_region
          %s317 = ssub.s32 4096, 4096
          %318 = vsyncadd [#allocation10], %s317
          %s319 = sshll.u32 [#allocation9], 4
          %s320 = int_to_ptr.vmem [resolvable:$true] %s319
          %325 = dma.hbm_to_vmem [thread:$0]  %s5, 4096, %s320, [#allocation10], 128, 128, 8
        $region32: #{tpu_custom_call.1} parent=11 // pred_fallthru
          _
        // Predicated region
        $region33: #{tpu_custom_call.1} parent=11 // pred_check
          %p326 = pneg %p177
        $region34: #{tpu_custom_call.1} parent=11 // pred_check_branch
          %328 = sbr.rel (%p326) target = $region36
        $region35: #{tpu_custom_call.1} parent=11 // pred_region
          _
        $region36: #{tpu_custom_call.1} parent=11 // pred_fallthru
          _
        // Predicated region
        $region37: #{tpu_custom_call.1} parent=11 // pred_check
          %p329 = pneg %p198
        $region38: #{tpu_custom_call.1} parent=11 // pred_check_branch
          %331 = sbr.rel (%p329) target = $region40
        $region39: #{tpu_custom_call.1} parent=11 // pred_region
          _
        $region40: #{tpu_custom_call.1} parent=11 // pred_fallthru
          _
        // Predicated region
        $region41: #{tpu_custom_call.1} parent=11 // pred_check
          %p332 = pneg %p219
        $region42: #{tpu_custom_call.1} parent=11 // pred_check_branch
          %334 = sbr.rel (%p332) target = $region44
        $region43: #{tpu_custom_call.1} parent=11 // pred_region
          _
        $region44: #{tpu_custom_call.1} parent=11 // pred_fallthru
          _
        // Predicated region
        $region45: #{tpu_custom_call.1} parent=11 // pred_check
          %p335 = pneg %p240
        $region46: #{tpu_custom_call.1} parent=11 // pred_check_branch
          %337 = sbr.rel (%p335) target = $region48
        $region47: #{tpu_custom_call.1} parent=11 // pred_region
          _
        $region48: #{tpu_custom_call.1} parent=11 // pred_fallthru
          _
      $region12: #{tpu_custom_call.1} parent=5 // pred_fallthru
        _
      %p338 = scmp.lt.s32.totalorder %s25, 2
      // Predicated region
      $region49: #{tpu_custom_call.1} parent=5 // pred_check
        %p339 = pneg %p338
      $region50: #{tpu_custom_call.1} parent=5 // pred_check_branch
        %341 = sbr.rel (%p339) target = $region52
      $region51: #{tpu_custom_call.1} parent=5 // pred_region
        // Predicated region
        $region53: #{tpu_custom_call.1} parent=51 // pred_check
          %p342 = pneg %p45
        $region54: #{tpu_custom_call.1} parent=51 // pred_check_branch
          %344 = sbr.rel (%p342) target = $region56
        $region55: #{tpu_custom_call.1} parent=51 // pred_region
          %s345 = sand.u32 %s35, 1
          %s346 = scalar_lea.sflag [#allocation5], %s345
          %s347 = sand.u32 %s35, 1
          %s348 = smul.addr %s347, 16
          %s349 = scalar_lea.vmem [#allocation4], %s348
          %s350 = smul.u32 2, %s25
          %s351 = ssub.s32 3, %s350
          %p352 = scmp.lt.s32.totalorder %s351, 2
          %s353 = scalar_select %p352, %s351, 2
          %s354 = smul.u32 128, %s353
          %s356 = ssub.s32 256, %s354
          %357 = vsyncadd %s346, %s356
          %p358 = scmp.ne.s32.totalorder 0, %s354
          %s359 = smul.addr %s350, 128
          %s360 = scalar_lea.hbm %s0, %s359
          %s361 = smul.u32 8, %s353
          %s362 = sshll.u32 %s349, 4
          %s363 = int_to_ptr.vmem [resolvable:$true] %s362
          %s364 = sshll.u32 %s361, 4
          %368 = dma.hbm_to_vmem [thread:$0]  (%p358), %s360, %s364, %s363, %s346, 128, 128, 8
        $region56: #{tpu_custom_call.1} parent=51 // pred_fallthru
          _
      $region52: #{tpu_custom_call.1} parent=5 // pred_fallthru
        _
      %p369 = scmp.le.s32.totalorder 1, %s25
      %p370 = scmp.lt.s32.totalorder %s25, 3
      %p371 = pnand %p369, %p370
      %p372 = pneg %p371
      // Predicated region
      $region57: #{tpu_custom_call.1} parent=5 // pred_check
        _
      $region58: #{tpu_custom_call.1} parent=5 // pred_check_branch
        %374 = sbr.rel (%p371) target = $region60
      $region59: #{tpu_custom_call.1} parent=5 // pred_region
        %s375 = ssub.s32 %s25, 1
        %s376 = sand.u32 %s38, 1
        %s377 = scalar_lea.sflag [#allocation5], %s376
        %s378 = sand.u32 %s38, 1
        %s379 = smul.addr %s378, 16
        %s380 = scalar_lea.vmem [#allocation4], %s379
        // Predicated region
        $region61: #{tpu_custom_call.1} parent=59 // pred_check
          %p381 = pneg %p51
        $region62: #{tpu_custom_call.1} parent=59 // pred_check_branch
          %383 = sbr.rel (%p381) target = $region64
        $region63: #{tpu_custom_call.1} parent=59 // pred_region
          %384 = dma.done %s377, 256
        $region64: #{tpu_custom_call.1} parent=59 // pred_fallthru
          _
        // Predicated region
        $region65: #{tpu_custom_call.1} parent=59 // pred_check
          %p385 = pneg %p72
        $region66: #{tpu_custom_call.1} parent=59 // pred_check_branch
          %387 = sbr.rel (%p385) target = $region68
        $region67: #{tpu_custom_call.1} parent=59 // pred_region
          %388 = dma.done [#allocation7], 1024
        $region68: #{tpu_custom_call.1} parent=59 // pred_fallthru
          _
        // Predicated region
        $region69: #{tpu_custom_call.1} parent=59 // pred_check
          %p389 = pneg %p114
        $region70: #{tpu_custom_call.1} parent=59 // pred_check_branch
          %391 = sbr.rel (%p389) target = $region72
        $region71: #{tpu_custom_call.1} parent=59 // pred_region
          %392 = dma.done [#allocation7], 2048
        $region72: #{tpu_custom_call.1} parent=59 // pred_fallthru
          _
        // Predicated region
        $region73: #{tpu_custom_call.1} parent=59 // pred_check
          %p393 = pneg %p156
        $region74: #{tpu_custom_call.1} parent=59 // pred_check_branch
          %395 = sbr.rel (%p393) target = $region76
        $region75: #{tpu_custom_call.1} parent=59 // pred_region
          %396 = dma.done [#allocation10], 4096
        $region76: #{tpu_custom_call.1} parent=59 // pred_fallthru
          _
        %s397 = sand.u32 %s38, 1
        %s398 = scalar_lea.sflag [#allocation5], %s397
        %s399 = sand.u32 %s38, 1
        %s400 = smul.addr %s399, 16
        %s401 = scalar_lea.vmem [#allocation4], %s400
        %p402 = pneg %p51
        %p403 = pneg %p48
        %p404 = pneg %p72
        %p405 = pneg %p69
        %p406 = pneg %p93
        %p407 = pneg %p90
        %p408 = pneg %p114
        %p409 = pneg %p111
        %p410 = pneg %p135
        %p411 = pneg %p132
        %p412 = pneg %p156
        %p413 = pneg %p153
        %p414 = pneg %p177
        %p415 = pneg %p174
        %p416 = pneg %p198
        %p417 = pneg %p195
        %p418 = pneg %p219
        %p419 = pneg %p216
        %p420 = pneg %p240
        %p421 = pneg %p237
        %p422 = pneg %p266
        %p423 = pneg %p263
        %s424 = sand.u32 %s253, 1
        %s425 = sand.u32 %s253, 1
        %s426 = smul.addr %s425, 16
        %s427 = scalar_lea.vmem [#allocation11], %s426
        %s428 = smul.u32 2, %s30
        %s429 = ssub.s32 3, %s428
        %p430 = scmp.lt.s32.totalorder %s429, 2
        %s431 = scalar_select %p430, %s429, 2
        %s432 = smul.u32 128, %s431
        %s433 = smul.u32 2, %s30
        %s434 = ssub.s32 3, %s433
        %p435 = scmp.lt.s32.totalorder %s434, 2
        %s436 = scalar_select %p435, %s434, 2
        %s437 = smul.u32 128, %s436
        %v439 = vld [vmem:[%s380] sm:$0xff]
        %v440 = vld [vmem:[%s380 + $0x8] sm:$0xff]
        %v441 = vpack.c.bf16 %v440, %v439
        %v442 = vld [vmem:[#allocation6] sm:$0xf]
        %v443 = vld [vmem:[#allocation6 + $0x4] sm:$0xf]
        %v444 = vld [vmem:[#allocation6 + $0x8] sm:$0xf]
        %v445 = vld [vmem:[#allocation6 + $0xc] sm:$0xf]
        %v446 = vld [vmem:[#allocation6 + $0x10] sm:$0xf]
        %v447 = vld [vmem:[#allocation6 + $0x14] sm:$0xf]
        %v448 = vld [vmem:[#allocation6 + $0x18] sm:$0xf]
        %v449 = vld [vmem:[#allocation6 + $0x1c] sm:$0xf]
        %v450 = vld [vmem:[#allocation6 + $0x20] sm:$0xf]
        %v451 = vld [vmem:[#allocation6 + $0x24] sm:$0xf]
        %v452 = vld [vmem:[#allocation6 + $0x28] sm:$0xf]
        %v453 = vld [vmem:[#allocation6 + $0x2c] sm:$0xf]
        %v454 = vld [vmem:[#allocation6 + $0x30] sm:$0xf]
        %v455 = vld [vmem:[#allocation6 + $0x34] sm:$0xf]
        %v456 = vld [vmem:[#allocation6 + $0x38] sm:$0xf]
        %v457 = vld [vmem:[#allocation6 + $0x3c] sm:$0xf]
        %v458 = vld [vmem:[%s2] sm:$0x1]
        %v460 = vlaneseq
        %v461 = vshrl.u32 %v460, 7
        %v462 = vsub.s32 0, %v461
        %v463 = vrot.slane %v458, %v462
        %v481 = vunpack.c.l.b16 %v442
        %v482 = vunpack.c.l.b16 %v443
        %v483 = vunpack.c.l.b16 %v444
        %v484 = vunpack.c.l.b16 %v445
        %v485 = vunpack.c.l.b16 %v446
        %v486 = vunpack.c.l.b16 %v447
        %v487 = vunpack.c.l.b16 %v448
        %v488 = vunpack.c.l.b16 %v449
        %v489 = vunpack.c.l.b16 %v450
        %v490 = vunpack.c.l.b16 %v451
        %v491 = vunpack.c.l.b16 %v452
        %v492 = vunpack.c.l.b16 %v453
        %v493 = vunpack.c.l.b16 %v454
        %v494 = vunpack.c.l.b16 %v455
        %v495 = vunpack.c.l.b16 %v456
        %v496 = vunpack.c.l.b16 %v457
        %v497 = vpack.c.b16 %v482, %v481
        %v498 = vpack.c.b16 %v484, %v483
        %v499 = vpack.c.b16 %v486, %v485
        %v500 = vpack.c.b16 %v488, %v487
        %v501 = vpack.c.b16 %v490, %v489
        %v502 = vpack.c.b16 %v492, %v491
        %v503 = vpack.c.b16 %v494, %v493
        %v504 = vpack.c.b16 %v496, %v495
        %513 = vmatprep.subr.bf16.mxu0 0
        %514 = vmatpush1.bf16.msra.mxu0 %v497
        %515 = vmatprep.subr.bf16.mxu0 0
        %516 = vmatpush1.bf16.msra.mxu0 %v498
        %517 = vmatprep.subr.bf16.mxu0 0
        %518 = vmatpush1.bf16.msra.mxu0 %v499
        %519 = vmatprep.subr.bf16.mxu0 0
        %520 = vmatpush1.bf16.msra.mxu0 %v500
        %521 = vmatprep.subr.bf16.mxu0 0
        %522 = vmatpush1.bf16.msra.mxu0 %v501
        %523 = vmatprep.subr.bf16.mxu0 0
        %524 = vmatpush1.bf16.msra.mxu0 %v502
        %525 = vmatprep.subr.bf16.mxu0 0
        %526 = vmatpush1.bf16.msra.mxu0 %v503
        %527 = vmatprep.subr.bf16.mxu0 0
        %528 = vmatpush1.bf16.msra.mxu0 %v504
        %529 = vmatprep.subr.bf16.mxu0 0
        %530 = vmatpush1.bf16.msra.mxu0 0
        %531 = vmatprep.subr.bf16.mxu0 0
        %532 = vmatpush1.bf16.msra.mxu0 0
        %533 = vmatprep.subr.bf16.mxu0 0
        %534 = vmatpush1.bf16.msra.mxu0 0
        %535 = vmatprep.subr.bf16.mxu0 0
        %536 = vmatpush1.bf16.msra.mxu0 0
        %537 = vmatprep.subr.bf16.mxu0 0
        %538 = vmatpush1.bf16.msra.mxu0 0
        %539 = vmatprep.subr.bf16.mxu0 0
        %540 = vmatpush1.bf16.msra.mxu0 0
        %541 = vmatprep.subr.bf16.mxu0 0
        %542 = vmatpush1.bf16.msra.mxu0 0
        %543 = vmatprep.subr.bf16.mxu0 0
        %544 = vmatpush1.bf16.msra.mxu0 0
        %545 = vmatprep.mubr.bf16.mxu0 0
        %546 = vmatmul.mubr.bf16.gmra.mrb[0].mxu0 %v441
        %v547 = vpop.f32.mrb[0].mxu0
        %v548 = vadd.f32 %v463, %v547
        %v549 = vpop.f32.mrb[0].mxu0
        %v550 = vpop.f32.mrb[0].mxu0
        %v551 = vadd.f32 %v463, %v550
        %v552 = vpop.f32.mrb[0].mxu0
        %553 = vdwg.mxu0
        %v554 = vpack.c.bf16 %v551, %v548
        %v555 = vmax.bf16 %v554, 0
        %v556 = vld [vmem:[#allocation8] sm:$0xff]
        %v557 = vld [vmem:[#allocation8 + $0x8] sm:$0xff]
        %v558 = vld [vmem:[#allocation8 + $0x10] sm:$0xff]
        %v559 = vld [vmem:[#allocation8 + $0x18] sm:$0xff]
        %v560 = vld [vmem:[#allocation8 + $0x20] sm:$0xff]
        %v561 = vld [vmem:[#allocation8 + $0x28] sm:$0xff]
        %v562 = vld [vmem:[#allocation8 + $0x30] sm:$0xff]
        %v563 = vld [vmem:[#allocation8 + $0x38] sm:$0xff]
        %v564 = vld [vmem:[#allocation8 + $0x40] sm:$0xff]
        %v565 = vld [vmem:[#allocation8 + $0x48] sm:$0xff]
        %v566 = vld [vmem:[#allocation8 + $0x50] sm:$0xff]
        %v567 = vld [vmem:[#allocation8 + $0x58] sm:$0xff]
        %v568 = vld [vmem:[#allocation8 + $0x60] sm:$0xff]
        %v569 = vld [vmem:[#allocation8 + $0x68] sm:$0xff]
        %v570 = vld [vmem:[#allocation8 + $0x70] sm:$0xff]
        %v571 = vld [vmem:[#allocation8 + $0x78] sm:$0xff]
        %v572 = vld [vmem:[%s4] sm:$0x3]
        %v574 = vlaneseq
        %v575 = vshrl.u32 %v574, 7
        %v576 = vsub.s32 0, %v575
        %v577 = vrot.slane %v572, %v576
        %v578 = vlaneseq
        %v579 = vshrl.u32 %v578, 7
        %v580 = vsub.s32 1, %v579
        %v581 = vrot.slane %v572, %v580
        %v600 = vunpack.c.l.b16 %v556
        %v601 = vunpack.c.h.b16 %v556
        %v602 = vunpack.c.l.b16 %v557
        %v603 = vunpack.c.h.b16 %v557
        %v604 = vunpack.c.l.b16 %v558
        %v605 = vunpack.c.h.b16 %v558
        %v606 = vunpack.c.l.b16 %v559
        %v607 = vunpack.c.h.b16 %v559
        %v608 = vunpack.c.l.b16 %v560
        %v609 = vunpack.c.h.b16 %v560
        %v610 = vunpack.c.l.b16 %v561
        %v611 = vunpack.c.h.b16 %v561
        %v612 = vunpack.c.l.b16 %v562
        %v613 = vunpack.c.h.b16 %v562
        %v614 = vunpack.c.l.b16 %v563
        %v615 = vunpack.c.h.b16 %v563
        %v616 = vunpack.c.l.b16 %v564
        %v617 = vunpack.c.h.b16 %v564
        %v618 = vunpack.c.l.b16 %v565
        %v619 = vunpack.c.h.b16 %v565
        %v620 = vunpack.c.l.b16 %v566
        %v621 = vunpack.c.h.b16 %v566
        %v622 = vunpack.c.l.b16 %v567
        %v623 = vunpack.c.h.b16 %v567
        %v624 = vunpack.c.l.b16 %v568
        %v625 = vunpack.c.h.b16 %v568
        %v626 = vunpack.c.l.b16 %v569
        %v627 = vunpack.c.h.b16 %v569
        %v628 = vunpack.c.l.b16 %v570
        %v629 = vunpack.c.h.b16 %v570
        %v630 = vunpack.c.l.b16 %v571
        %v631 = vunpack.c.h.b16 %v571
        %v632 = vpack.c.b16 %v602, %v600
        %v633 = vpack.c.b16 %v603, %v601
        %v634 = vpack.c.b16 %v606, %v604
        %v635 = vpack.c.b16 %v607, %v605
        %v636 = vpack.c.b16 %v610, %v608
        %v637 = vpack.c.b16 %v611, %v609
        %v638 = vpack.c.b16 %v614, %v612
        %v639 = vpack.c.b16 %v615, %v613
        %v640 = vpack.c.b16 %v618, %v616
        %v641 = vpack.c.b16 %v619, %v617
        %v642 = vpack.c.b16 %v622, %v620
        %v643 = vpack.c.b16 %v623, %v621
        %v644 = vpack.c.b16 %v626, %v624
        %v645 = vpack.c.b16 %v627, %v625
        %v646 = vpack.c.b16 %v630, %v628
        %v647 = vpack.c.b16 %v631, %v629
        %664 = vmatprep.subr.bf16.mxu0 %v633
        %665 = vmatpush1.bf16.msra.mxu0 %v632
        %666 = vmatprep.subr.bf16.mxu0 %v635
        %667 = vmatpush1.bf16.msra.mxu0 %v634
        %668 = vmatprep.subr.bf16.mxu0 %v637
        %669 = vmatpush1.bf16.msra.mxu0 %v636
        %670 = vmatprep.subr.bf16.mxu0 %v639
        %671 = vmatpush1.bf16.msra.mxu0 %v638
        %672 = vmatprep.subr.bf16.mxu0 %v641
        %673 = vmatpush1.bf16.msra.mxu0 %v640
        %674 = vmatprep.subr.bf16.mxu0 %v643
        %675 = vmatpush1.bf16.msra.mxu0 %v642
        %676 = vmatprep.subr.bf16.mxu0 %v645
        %677 = vmatpush1.bf16.msra.mxu0 %v644
        %678 = vmatprep.subr.bf16.mxu0 %v647
        %679 = vmatpush1.bf16.msra.mxu0 %v646
        %680 = vmatprep.subr.bf16.mxu0 0
        %681 = vmatpush1.bf16.msra.mxu0 0
        %682 = vmatprep.subr.bf16.mxu0 0
        %683 = vmatpush1.bf16.msra.mxu0 0
        %684 = vmatprep.subr.bf16.mxu0 0
        %685 = vmatpush1.bf16.msra.mxu0 0
        %686 = vmatprep.subr.bf16.mxu0 0
        %687 = vmatpush1.bf16.msra.mxu0 0
        %688 = vmatprep.subr.bf16.mxu0 0
        %689 = vmatpush1.bf16.msra.mxu0 0
        %690 = vmatprep.subr.bf16.mxu0 0
        %691 = vmatpush1.bf16.msra.mxu0 0
        %692 = vmatprep.subr.bf16.mxu0 0
        %693 = vmatpush1.bf16.msra.mxu0 0
        %694 = vmatprep.subr.bf16.mxu0 0
        %695 = vmatpush1.bf16.msra.mxu0 0
        %696 = vmatprep.mubr.bf16.mxu0 0
        %697 = vmatmul.mubr.bf16.gmra.mrb[0].mxu0 %v555
        %v698 = vpop.f32.mrb[0].mxu0
        %v699 = vadd.f32 %v577, %v698
        %v700 = vpop.f32.mrb[0].mxu0
        %v701 = vadd.f32 %v581, %v700
        %v702 = vpop.f32.mrb[0].mxu0
        %v703 = vadd.f32 %v577, %v702
        %v704 = vpop.f32.mrb[0].mxu0
        %v705 = vadd.f32 %v581, %v704
        %706 = vdwg.mxu0
        %v707 = vpack.c.bf16 %v703, %v699
        %v708 = vpack.c.bf16 %v705, %v701
        %v709 = vmax.bf16 %v707, 0
        %v710 = vmax.bf16 %v708, 0
        %v711 = vld [vmem:[#allocation9] sm:$0xff]
        %v712 = vld [vmem:[#allocation9 + $0x8] sm:$0xff]
        %v713 = vld [vmem:[#allocation9 + $0x10] sm:$0xff]
        %v714 = vld [vmem:[#allocation9 + $0x18] sm:$0xff]
        %v715 = vld [vmem:[#allocation9 + $0x20] sm:$0xff]
        %v716 = vld [vmem:[#allocation9 + $0x28] sm:$0xff]
        %v717 = vld [vmem:[#allocation9 + $0x30] sm:$0xff]
        %v718 = vld [vmem:[#allocation9 + $0x38] sm:$0xff]
        %v719 = vld [vmem:[#allocation9 + $0x40] sm:$0xff]
        %v720 = vld [vmem:[#allocation9 + $0x48] sm:$0xff]
        %v721 = vld [vmem:[#allocation9 + $0x50] sm:$0xff]
        %v722 = vld [vmem:[#allocation9 + $0x58] sm:$0xff]
        %v723 = vld [vmem:[#allocation9 + $0x60] sm:$0xff]
        %v724 = vld [vmem:[#allocation9 + $0x68] sm:$0xff]
        %v725 = vld [vmem:[#allocation9 + $0x70] sm:$0xff]
        %v726 = vld [vmem:[#allocation9 + $0x78] sm:$0xff]
        %v727 = vld [vmem:[#allocation9 + $0x80] sm:$0xff]
        %v728 = vld [vmem:[#allocation9 + $0x88] sm:$0xff]
        %v729 = vld [vmem:[#allocation9 + $0x90] sm:$0xff]
        %v730 = vld [vmem:[#allocation9 + $0x98] sm:$0xff]
        %v731 = vld [vmem:[#allocation9 + $0xa0] sm:$0xff]
        %v732 = vld [vmem:[#allocation9 + $0xa8] sm:$0xff]
        %v733 = vld [vmem:[#allocation9 + $0xb0] sm:$0xff]
        %v734 = vld [vmem:[#allocation9 + $0xb8] sm:$0xff]
        %v735 = vld [vmem:[#allocation9 + $0xc0] sm:$0xff]
        %v736 = vld [vmem:[#allocation9 + $0xc8] sm:$0xff]
        %v737 = vld [vmem:[#allocation9 + $0xd0] sm:$0xff]
        %v738 = vld [vmem:[#allocation9 + $0xd8] sm:$0xff]
        %v739 = vld [vmem:[#allocation9 + $0xe0] sm:$0xff]
        %v740 = vld [vmem:[#allocation9 + $0xe8] sm:$0xff]
        %v741 = vld [vmem:[#allocation9 + $0xf0] sm:$0xff]
        %v742 = vld [vmem:[#allocation9 + $0xf8] sm:$0xff]
        %v743 = vld [vmem:[%s6] sm:$0x3]
        %v745 = vlaneseq
        %v746 = vshrl.u32 %v745, 7
        %v747 = vsub.s32 0, %v746
        %v748 = vrot.slane %v743, %v747
        %v749 = vlaneseq
        %v750 = vshrl.u32 %v749, 7
        %v751 = vsub.s32 1, %v750
        %v752 = vrot.slane %v743, %v751
        %v787 = vunpack.c.l.b16 %v711
        %v788 = vunpack.c.h.b16 %v711
        %v789 = vunpack.c.l.b16 %v712
        %v790 = vunpack.c.h.b16 %v712
        %v791 = vunpack.c.l.b16 %v713
        %v792 = vunpack.c.h.b16 %v713
        %v793 = vunpack.c.l.b16 %v714
        %v794 = vunpack.c.h.b16 %v714
        %v795 = vunpack.c.l.b16 %v715
        %v796 = vunpack.c.h.b16 %v715
        %v797 = vunpack.c.l.b16 %v716
        %v798 = vunpack.c.h.b16 %v716
        %v799 = vunpack.c.l.b16 %v717
        %v800 = vunpack.c.h.b16 %v717
        %v801 = vunpack.c.l.b16 %v718
        %v802 = vunpack.c.h.b16 %v718
        %v803 = vunpack.c.l.b16 %v719
        %v804 = vunpack.c.h.b16 %v719
        %v805 = vunpack.c.l.b16 %v720
        %v806 = vunpack.c.h.b16 %v720
        %v807 = vunpack.c.l.b16 %v721
        %v808 = vunpack.c.h.b16 %v721
        %v809 = vunpack.c.l.b16 %v722
        %v810 = vunpack.c.h.b16 %v722
        %v811 = vunpack.c.l.b16 %v723
        %v812 = vunpack.c.h.b16 %v723
        %v813 = vunpack.c.l.b16 %v724
        %v814 = vunpack.c.h.b16 %v724
        %v815 = vunpack.c.l.b16 %v725
        %v816 = vunpack.c.h.b16 %v725
        %v817 = vunpack.c.l.b16 %v726
        %v818 = vunpack.c.h.b16 %v726
        %v819 = vunpack.c.l.b16 %v727
        %v820 = vunpack.c.h.b16 %v727
        %v821 = vunpack.c.l.b16 %v728
        %v822 = vunpack.c.h.b16 %v728
        %v823 = vunpack.c.l.b16 %v729
        %v824 = vunpack.c.h.b16 %v729
        %v825 = vunpack.c.l.b16 %v730
        %v826 = vunpack.c.h.b16 %v730
        %v827 = vunpack.c.l.b16 %v731
        %v828 = vunpack.c.h.b16 %v731
        %v829 = vunpack.c.l.b16 %v732
        %v830 = vunpack.c.h.b16 %v732
        %v831 = vunpack.c.l.b16 %v733
        %v832 = vunpack.c.h.b16 %v733
        %v833 = vunpack.c.l.b16 %v734
        %v834 = vunpack.c.h.b16 %v734
        %v835 = vunpack.c.l.b16 %v735
        %v836 = vunpack.c.h.b16 %v735
        %v837 = vunpack.c.l.b16 %v736
        %v838 = vunpack.c.h.b16 %v736
        %v839 = vunpack.c.l.b16 %v737
        %v840 = vunpack.c.h.b16 %v737
        %v841 = vunpack.c.l.b16 %v738
        %v842 = vunpack.c.h.b16 %v738
        %v843 = vunpack.c.l.b16 %v739
        %v844 = vunpack.c.h.b16 %v739
        %v845 = vunpack.c.l.b16 %v740
        %v846 = vunpack.c.h.b16 %v740
        %v847 = vunpack.c.l.b16 %v741
        %v848 = vunpack.c.h.b16 %v741
        %v849 = vunpack.c.l.b16 %v742
        %v850 = vunpack.c.h.b16 %v742
        %v851 = vpack.c.b16 %v789, %v787
        %v852 = vpack.c.b16 %v790, %v788
        %v853 = vpack.c.b16 %v793, %v791
        %v854 = vpack.c.b16 %v794, %v792
        %v855 = vpack.c.b16 %v797, %v795
        %v856 = vpack.c.b16 %v798, %v796
        %v857 = vpack.c.b16 %v801, %v799
        %v858 = vpack.c.b16 %v802, %v800
        %v859 = vpack.c.b16 %v805, %v803
        %v860 = vpack.c.b16 %v806, %v804
        %v861 = vpack.c.b16 %v809, %v807
        %v862 = vpack.c.b16 %v810, %v808
        %v863 = vpack.c.b16 %v813, %v811
        %v864 = vpack.c.b16 %v814, %v812
        %v865 = vpack.c.b16 %v817, %v815
        %v866 = vpack.c.b16 %v818, %v816
        %v867 = vpack.c.b16 %v821, %v819
        %v868 = vpack.c.b16 %v822, %v820
        %v869 = vpack.c.b16 %v825, %v823
        %v870 = vpack.c.b16 %v826, %v824
        %v871 = vpack.c.b16 %v829, %v827
        %v872 = vpack.c.b16 %v830, %v828
        %v873 = vpack.c.b16 %v833, %v831
        %v874 = vpack.c.b16 %v834, %v832
        %v875 = vpack.c.b16 %v837, %v835
        %v876 = vpack.c.b16 %v838, %v836
        %v877 = vpack.c.b16 %v841, %v839
        %v878 = vpack.c.b16 %v842, %v840
        %v879 = vpack.c.b16 %v845, %v843
        %v880 = vpack.c.b16 %v846, %v844
        %v881 = vpack.c.b16 %v849, %v847
        %v882 = vpack.c.b16 %v850, %v848
        %915 = vmatprep.subr.bf16.mxu0 %v852
        %916 = vmatpush1.bf16.msra.mxu0 %v851
        %917 = vmatprep.subr.bf16.mxu0 %v854
        %918 = vmatpush1.bf16.msra.mxu0 %v853
        %919 = vmatprep.subr.bf16.mxu0 %v856
        %920 = vmatpush1.bf16.msra.mxu0 %v855
        %921 = vmatprep.subr.bf16.mxu0 %v858
        %922 = vmatpush1.bf16.msra.mxu0 %v857
        %923 = vmatprep.subr.bf16.mxu0 %v860
        %924 = vmatpush1.bf16.msra.mxu0 %v859
        %925 = vmatprep.subr.bf16.mxu0 %v862
        %926 = vmatpush1.bf16.msra.mxu0 %v861
        %927 = vmatprep.subr.bf16.mxu0 %v864
        %928 = vmatpush1.bf16.msra.mxu0 %v863
        %929 = vmatprep.subr.bf16.mxu0 %v866
        %930 = vmatpush1.bf16.msra.mxu0 %v865
        %931 = vmatprep.subr.bf16.mxu0 %v868
        %932 = vmatpush1.bf16.msra.mxu0 %v867
        %933 = vmatprep.subr.bf16.mxu0 %v870
        %934 = vmatpush1.bf16.msra.mxu0 %v869
        %935 = vmatprep.subr.bf16.mxu0 %v872
        %936 = vmatpush1.bf16.msra.mxu0 %v871
        %937 = vmatprep.subr.bf16.mxu0 %v874
        %938 = vmatpush1.bf16.msra.mxu0 %v873
        %939 = vmatprep.subr.bf16.mxu0 %v876
        %940 = vmatpush1.bf16.msra.mxu0 %v875
        %941 = vmatprep.subr.bf16.mxu0 %v878
        %942 = vmatpush1.bf16.msra.mxu0 %v877
        %943 = vmatprep.subr.bf16.mxu0 %v880
        %944 = vmatpush1.bf16.msra.mxu0 %v879
        %945 = vmatprep.subr.bf16.mxu0 %v882
        %946 = vmatpush1.bf16.msra.mxu0 %v881
        %947 = vmatprep.mubr.bf16.mxu0 %v710
        %948 = vmatmul.mubr.bf16.gmra.mrb[0].mxu0 %v709
        %v949 = vpop.f32.mrb[0].mxu0
        %v950 = vadd.f32 %v748, %v949
        %v951 = vpop.f32.mrb[0].mxu0
        %v952 = vadd.f32 %v752, %v951
        %v953 = vpop.f32.mrb[0].mxu0
        %v954 = vadd.f32 %v748, %v953
        %v955 = vpop.f32.mrb[0].mxu0
        %v956 = vadd.f32 %v752, %v955
        %957 = vdwg.mxu0
        %v958 = vmax.f32 %v950, 0.0
        %v959 = vmax.f32 %v952, 0.0
        %v960 = vmax.f32 %v954, 0.0
        %v961 = vmax.f32 %v956, 0.0
        %v962 = vadd.f32 %v958, %v959
        %963 = vadd.xlane.f32.xlu0 %v962
        %v964 = vpop.xlane.xlu0 %963
        %v965 = vadd.f32 %v960, %v961
        %966 = vadd.xlane.f32.xlu0 %v965
        %v967 = vpop.xlane.xlu0 %966
        %v968 = vmul.f32 %v964, 0.00390625
        %v969 = vmul.f32 %v967, 0.00390625
        %v970 = vmul.f32 %v958, %v958
        %v971 = vmul.f32 %v959, %v959
        %v972 = vmul.f32 %v960, %v960
        %v973 = vmul.f32 %v961, %v961
        %v974 = vadd.f32 %v970, %v971
        %975 = vadd.xlane.f32.xlu0 %v974
        %v976 = vpop.xlane.xlu0 %975
        %v977 = vadd.f32 %v972, %v973
        %978 = vadd.xlane.f32.xlu0 %v977
        %v979 = vpop.xlane.xlu0 %978
        %v980 = vmul.f32 %v976, 0.00390625
        %v981 = vmul.f32 %v979, 0.00390625
        %v982 = vmul.f32 %v968, %v968
        %v983 = vmul.f32 %v969, %v969
        %v984 = vsub.f32 %v980, %v982
        %v985 = vsub.f32 %v981, %v983
        %v986 = vmax.f32 %v984, 0.0
        %v987 = vmax.f32 %v985, 0.0
        %v988 = vld [vmem:[%s7] sm:$0x3]
        %v990 = vlaneseq
        %v991 = vshrl.u32 %v990, 7
        %v992 = vsub.s32 0, %v991
        %v993 = vrot.slane %v988, %v992
        %v994 = vlaneseq
        %v995 = vshrl.u32 %v994, 7
        %v996 = vsub.s32 1, %v995
        %v997 = vrot.slane %v988, %v996
        %v1000 = vmul.f32 %v958, %v993
        %v1001 = vmul.f32 %v959, %v997
        %v1002 = vmul.f32 %v960, %v993
        %v1003 = vmul.f32 %v961, %v997
        %v1004 = vadd.f32 %v1000, %v1001
        %1005 = vadd.xlane.f32.xlu0 %v1004
        %v1006 = vpop.xlane.xlu0 %1005
        %v1007 = vadd.f32 %v1002, %v1003
        %1008 = vadd.xlane.f32.xlu0 %v1007
        %v1009 = vpop.xlane.xlu0 %1008
        %v1010 = vadd.f32 %v986, 1e-05
        %v1011 = vadd.f32 %v987, 1e-05
        %v1012 = vrsqrt.pop %v1010
        %v1013 = vrsqrt.pop %v1011
        %v1014 = vld [vmem:[#allocation2] sm:$0x1]
        %v1016 = vlaneseq
        %v1017 = vshrl.u32 %v1016, 7
        %v1018 = vsub.s32 0, %v1017
        %v1019 = vrot.slane %v1014, %v1018
        %v1021 = vmul.f32 %v968, %v1019
        %v1022 = vmul.f32 %v969, %v1019
        %v1023 = vsub.f32 %v1006, %v1021
        %v1024 = vsub.f32 %v1009, %v1022
        %v1025 = vmul.f32 %v1012, %v1023
        %v1026 = vmul.f32 %v1013, %v1024
        %v1027 = vld [vmem:[#allocation3] sm:$0x1]
        %v1029 = vlaneseq
        %v1030 = vshrl.u32 %v1029, 7
        %v1031 = vsub.s32 0, %v1030
        %v1032 = vrot.slane %v1027, %v1031
        %v1034 = vadd.f32 %v1025, %v1032
        %v1035 = vadd.f32 %v1026, %v1032
        %vm1036 = vcmask 7168
        %1037 = vst.msk [vmem:[%s427] sm:$0xff] %vm1036, %v1034
        %1038 = vst.msk [vmem:[%s427 + $0x8] sm:$0xff] %vm1036, %v1035
        %s1039 = sand.u32 %s253, 1
        %s1040 = sand.u32 %s253, 1
        %s1041 = smul.addr %s1040, 16
        %s1042 = scalar_lea.vmem [#allocation11], %s1041
        // Predicated region
        $region77: #{tpu_custom_call.1} parent=59 // pred_check
          %p1043 = pneg %p263
        $region78: #{tpu_custom_call.1} parent=59 // pred_check_branch
          %1045 = sbr.rel (%p1043) target = $region80
        $region79: #{tpu_custom_call.1} parent=59 // pred_region
          %s1046 = smul.u32 2, %s30
          %s1047 = ssub.s32 3, %s1046
          %p1048 = scmp.lt.s32.totalorder %s1047, 2
          %s1049 = scalar_select %p1048, %s1047, 2
          %s1050 = smul.u32 128, %s1049
          %p1051 = scmp.ne.s32.totalorder 0, %s1050
          %s1052 = smul.addr %s1046, 8
          %s1053 = scalar_lea.vmem %s10, %s1052
          // Predicated region
          $region81: #{tpu_custom_call.1} parent=79 // pred_check
            %p1054 = pneg %p1051
          $region82: #{tpu_custom_call.1} parent=79 // pred_check_branch
            %1056 = sbr.rel (%p1054) target = $region84
          $region83: #{tpu_custom_call.1} parent=79 // pred_region
            // Predicated region
            $region85: #{tpu_custom_call.1} parent=83 // pred_check
              _
            $region86: #{tpu_custom_call.1} parent=83 // pred_check_branch
              %1058 = sbr.rel (0) target = $region88
            $region87: #{tpu_custom_call.1} parent=83 // pred_region
              // Predicated region
              $region107: #{tpu_custom_call.1} parent=87 // pred_check
                _
              $region108: #{tpu_custom_call.1} parent=87 // pred_check_branch
                %1109 = sbr.rel (0) target = $region110
              $region109: #{tpu_custom_call.1} parent=87 // pred_region
                %s1110 = sshrl.u32 %s1049, 1
                // While loop
                $region111: #{tpu_custom_call.1} parent=109 // loop_pre_header
                  _
                $region112: #{tpu_custom_call.1} parent=109 // loop_header
                  %s1112 = sphi 0, %s1114
                  %p1113 = scmp.ge.s32.totalorder %s1112, %s1110
                  %s1117 = sphi 0, %s1126
                  %s1118 = sphi %s1042, %s1129
                  %s1119 = sphi %s1053, %s1130
                $region113: #{tpu_custom_call.1} parent=109 // loop_header_branch
                  %1116 = sbr.rel (%p1113) target = $region117
                $region114: #{tpu_custom_call.1} parent=109 // loop_body
                  %v1120 = vld [vmem:[%s1118] sm:$0xff]
                  %1121 = vst [vmem:[%s1119] sm:$0xff] %v1120
                  %v1122 = vld [vmem:[%s1118 + $0x8] sm:$0xff]
                  %1123 = vst [vmem:[%s1119 + $0x8] sm:$0xff] %v1122
                  %s1124 = sadd.s32 1, %s1117
                  %p1125 = scmp.ge.s32.totalorder %s1124, %s1110
                  %s1126 = scalar_select %p1125, 0, %s1124
                  %s1127 = smul.u32 %s1126, 16
                  %s1128 = smul.u32 %s1126, 16
                  %s1129 = scalar_lea.vmem %s1042, %s1127 [#allocation11]
                  %s1130 = scalar_lea.vmem %s1053, %s1128
                $region115: #{tpu_custom_call.1} parent=109 // loop_footer
                  %s1114 = sadd.s32 %s1112, 1
                $region116: #{tpu_custom_call.1} parent=109 // loop_footer_branch
                  %1111 = sbr.rel target = $region112
                $region117: #{tpu_custom_call.1} parent=109 // loop_exit
                  _
                %s1131 = sshrl.u32 %s1049, 1
                %s1132 = sand.u32 %s1049, 1
                %s1133 = smul.u32 %s1131, 2
                %s1134 = smul.u32 8, %s1133
                %s1135 = scalar_lea.vmem %s1042, %s1134 [#allocation11]
                %s1136 = smul.u32 8, %s1133
                %s1137 = scalar_lea.vmem %s1053, %s1136
                // While loop
                $region118: #{tpu_custom_call.1} parent=109 // loop_pre_header
                  _
                $region119: #{tpu_custom_call.1} parent=109 // loop_header
                  %s1139 = sphi 0, %s1141
                  %p1140 = scmp.ge.s32.totalorder %s1139, %s1132
                  %s1144 = sphi 0, %s1151
                  %s1145 = sphi %s1135, %s1154
                  %s1146 = sphi %s1137, %s1155
                $region120: #{tpu_custom_call.1} parent=109 // loop_header_branch
                  %1143 = sbr.rel (%p1140) target = $region124
                $region121: #{tpu_custom_call.1} parent=109 // loop_body
                  %v1147 = vld [vmem:[%s1145] sm:$0xff]
                  %1148 = vst [vmem:[%s1146] sm:$0xff] %v1147
                  %s1149 = sadd.s32 1, %s1144
                  %p1150 = scmp.ge.s32.totalorder %s1149, %s1132
                  %s1151 = scalar_select %p1150, 0, %s1149
                  %s1152 = smul.u32 %s1151, 8
                  %s1153 = smul.u32 %s1151, 8
                  %s1154 = scalar_lea.vmem %s1135, %s1152 [#allocation11]
                  %s1155 = scalar_lea.vmem %s1137, %s1153
                $region122: #{tpu_custom_call.1} parent=109 // loop_footer
                  %s1141 = sadd.s32 %s1139, 1
                $region123: #{tpu_custom_call.1} parent=109 // loop_footer_branch
                  %1138 = sbr.rel target = $region119
                $region124: #{tpu_custom_call.1} parent=109 // loop_exit
                  _
              $region110: #{tpu_custom_call.1} parent=87 // pred_fallthru
                _
              // Predicated region
              $region125: #{tpu_custom_call.1} parent=87 // pred_check
                _
              $region126: #{tpu_custom_call.1} parent=87 // pred_check_branch
                %1157 = sbr.rel target = $region128
              $region127: #{tpu_custom_call.1} parent=87 // pred_region
                _
              $region128: #{tpu_custom_call.1} parent=87 // pred_fallthru
                _
            $region88: #{tpu_custom_call.1} parent=83 // pred_fallthru
              _
            // Predicated region
            $region89: #{tpu_custom_call.1} parent=83 // pred_check
              _
            $region90: #{tpu_custom_call.1} parent=83 // pred_check_branch
              %1060 = sbr.rel target = $region92
            $region91: #{tpu_custom_call.1} parent=83 // pred_region
              %s1062 = sshrl.u32 %s1049, 1
              // While loop
              $region93: #{tpu_custom_call.1} parent=91 // loop_pre_header
                _
              $region94: #{tpu_custom_call.1} parent=91 // loop_header
                %s1064 = sphi 0, %s1066
                %p1065 = scmp.ge.s32.totalorder %s1064, %s1062
                %s1069 = sphi 0, %s1078
                %s1070 = sphi %s1042, %s1081
                %s1071 = sphi %s1053, %s1082
              $region95: #{tpu_custom_call.1} parent=91 // loop_header_branch
                %1068 = sbr.rel (%p1065) target = $region99
              $region96: #{tpu_custom_call.1} parent=91 // loop_body
                %v1072 = vld [vmem:[%s1070] sm:$0xff]
                %1073 = vst [vmem:[%s1071] sm:$0xff] %v1072
                %v1074 = vld [vmem:[%s1070 + $0x8] sm:$0xff]
                %1075 = vst [vmem:[%s1071 + $0x8] sm:$0xff] %v1074
                %s1076 = sadd.s32 1, %s1069
                %p1077 = scmp.ge.s32.totalorder %s1076, %s1062
                %s1078 = scalar_select %p1077, 0, %s1076
                %s1079 = smul.u32 %s1078, 16
                %s1080 = smul.u32 %s1078, 16
                %s1081 = scalar_lea.vmem %s1042, %s1079 [#allocation11]
                %s1082 = scalar_lea.vmem %s1053, %s1080
              $region97: #{tpu_custom_call.1} parent=91 // loop_footer
                %s1066 = sadd.s32 %s1064, 1
              $region98: #{tpu_custom_call.1} parent=91 // loop_footer_branch
                %1063 = sbr.rel target = $region94
              $region99: #{tpu_custom_call.1} parent=91 // loop_exit
                _
              %s1083 = sshrl.u32 %s1049, 1
              %s1084 = sand.u32 %s1049, 1
              %s1085 = smul.u32 %s1083, 2
              %s1086 = smul.u32 8, %s1085
              %s1087 = scalar_lea.vmem %s1042, %s1086 [#allocation11]
              %s1088 = smul.u32 8, %s1085
              %s1089 = scalar_lea.vmem %s1053, %s1088
              // While loop
              $region100: #{tpu_custom_call.1} parent=91 // loop_pre_header
                _
              $region101: #{tpu_custom_call.1} parent=91 // loop_header
                %s1091 = sphi 0, %s1093
                %p1092 = scmp.ge.s32.totalorder %s1091, %s1084
                %s1096 = sphi 0, %s1103
                %s1097 = sphi %s1087, %s1106
                %s1098 = sphi %s1089, %s1107
              $region102: #{tpu_custom_call.1} parent=91 // loop_header_branch
                %1095 = sbr.rel (%p1092) target = $region106
              $region103: #{tpu_custom_call.1} parent=91 // loop_body
                %v1099 = vld [vmem:[%s1097] sm:$0xff]
                %1100 = vst [vmem:[%s1098] sm:$0xff] %v1099
                %s1101 = sadd.s32 1, %s1096
                %p1102 = scmp.ge.s32.totalorder %s1101, %s1084
                %s1103 = scalar_select %p1102, 0, %s1101
                %s1104 = smul.u32 %s1103, 8
                %s1105 = smul.u32 %s1103, 8
                %s1106 = scalar_lea.vmem %s1087, %s1104 [#allocation11]
                %s1107 = scalar_lea.vmem %s1089, %s1105
              $region104: #{tpu_custom_call.1} parent=91 // loop_footer
                %s1093 = sadd.s32 %s1091, 1
              $region105: #{tpu_custom_call.1} parent=91 // loop_footer_branch
                %1090 = sbr.rel target = $region101
              $region106: #{tpu_custom_call.1} parent=91 // loop_exit
                _
            $region92: #{tpu_custom_call.1} parent=83 // pred_fallthru
              _
          $region84: #{tpu_custom_call.1} parent=79 // pred_fallthru
            _
          %1158 = vnop
        $region80: #{tpu_custom_call.1} parent=59 // pred_fallthru
          _
      $region60: #{tpu_custom_call.1} parent=5 // pred_fallthru
        _
      %p1159 = scmp.le.s32.totalorder 2, %s25
      // Predicated region
      $region129: #{tpu_custom_call.1} parent=5 // pred_check
        %p1160 = pneg %p1159
      $region130: #{tpu_custom_call.1} parent=5 // pred_check_branch
        %1162 = sbr.rel (%p1160) target = $region132
      $region131: #{tpu_custom_call.1} parent=5 // pred_region
        %s1163 = ssub.s32 %s25, 2
        // Predicated region
        $region133: #{tpu_custom_call.1} parent=131 // pred_check
          %p1164 = pneg %p269
        $region134: #{tpu_custom_call.1} parent=131 // pred_check_branch
          %1166 = sbr.rel (%p1164) target = $region136
        $region135: #{tpu_custom_call.1} parent=131 // pred_region
          %s1167 = sand.u32 %s254, 1
          %s1168 = sand.u32 %s254, 1
          %s1169 = smul.addr %s1168, 16
          %s1170 = scalar_lea.vmem [#allocation11], %s1169
        $region136: #{tpu_custom_call.1} parent=131 // pred_fallthru
          _
      $region132: #{tpu_custom_call.1} parent=5 // pred_fallthru
        _
    $region6: #{tpu_custom_call.1} parent=1 // loop_footer
      %s29 = sadd.s32 1, %s25
    $region7: #{tpu_custom_call.1} parent=1 // loop_footer_branch
      %24 = sbr.rel target = $region3
    $region8: #{tpu_custom_call.1} parent=1 // loop_exit
      _
    %1171 = vsyncpa [#allocation5], 1
    %s1172 = scalar_lea.sflag [#allocation5], 1
    %1173 = vsyncpa %s1172, 1
    %1174 = vsyncpa [#allocation7], 1
    %1175 = vsyncpa [#allocation10], 1

</llo_original>
